<compile_context>
chip_gen: v6e
topology: v6e:2x2x1
jax: 0.10.0
libtpu: 0.0.40
codegen_flags: <defaults>
</compile_context>

<pallas_src>
import collections.abc as collections_abc

import jax
import jax.numpy as jnp
from jax.experimental import pallas as pl
from jax.experimental.pallas import tpu as pltpu

LANE = 128


def _round_up(n, m):
    return ((n + m - 1) // m) * m


def _make_mlp_kernel(num_hidden):
    """Fused MLP: relu(x@W1+b1) -> ... -> relu(.@Wn+bn) -> (1,TILE_B) output row."""

    def kernel(*refs):
        x_ref, o_ref = refs[0], refs[-1]
        h = x_ref[...]                                    # (TILE_B, F_pad), matmul dtype
        for layer in range(num_hidden):
            w_ref = refs[1 + 2 * layer]                   # (D_in_pad, D_out_pad)
            b_ref = refs[2 + 2 * layer]                   # (1, D_out_pad), f32
            # MXU matmul in the weight dtype (bf16 by default) with f32
            # accumulation; bias + ReLU run in f32 on the VPU.
            h = jnp.dot(h.astype(w_ref.dtype), w_ref[...],
                        preferred_element_type=jnp.float32)
            h = jnp.maximum(h + b_ref[...], 0.0)

        w_out_ref = refs[1 + 2 * num_hidden]              # (1, H_pad)
        b_out_ref = refs[2 + 2 * num_hidden]              # (1, 1), f32
        # out_features == 1: produce the result as a lane-dense (1, TILE_B) row
        # with the batch on the lane axis -> full-width unmasked vector store
        # instead of a 1-lane masked store.
        y = jnp.dot(w_out_ref[...], h.astype(w_out_ref.dtype).T,
                    preferred_element_type=jnp.float32)   # (1, TILE_B)
        o_ref[...] = (y + b_out_ref[...]).astype(o_ref.dtype)

    return kernel


def mlp_forward(x, params, *, matmul_dtype=jnp.bfloat16, tile_b=None):
    """params = [(W1,b1), ..., (Wn,bn), (W_out,b_out)].

    W stored as [in_features, out_features] (transpose of PyTorch), b as [1, out].
    The final layer must have out_features == 1 (as in the PyTorch module).
    """
    *hidden_params, (w_out, b_out) = params
    num_hidden = len(hidden_params)
    B, F = x.shape
    assert w_out.shape[-1] == 1, "output layer must have out_features == 1"

    if tile_b is None:
        # >=512 rows keeps the HBM pipeline near roofline at large B; 128 is
        # enough for small batches. Both fit comfortably in v7x's 64 MiB VMEM.
        tile_b = 512 if B >= 512 else 128
    b_pad = _round_up(max(B, 1), tile_b)
    num_tiles = b_pad // tile_b

    # Zero-pad every feature dim to a multiple of 128 lanes. Zero padding is
    # exactly neutral: padded x columns meet zero weight rows, padded hidden
    # columns get zero weight + zero bias (ReLU(0) = 0), padded batch rows are
    # sliced off at the end.
    f_pad = _round_up(F, LANE)
    x_p = jnp.zeros((b_pad, f_pad), matmul_dtype).at[:B, :F].set(x.astype(matmul_dtype))

    operands = [x_p]
    in_specs = [pl.BlockSpec((tile_b, f_pad), lambda i: (i, 0))]

    d_in, d_in_p = F, f_pad
    for w, b in hidden_params:
        d_out = w.shape[1]
        d_out_p = _round_up(d_out, LANE)
        w_p = jnp.zeros((d_in_p, d_out_p), matmul_dtype).at[:d_in, :d_out].set(
            w.astype(matmul_dtype))
        b_p = jnp.zeros((1, d_out_p), jnp.float32).at[:, :d_out].set(
            b.reshape(1, d_out).astype(jnp.float32))
        operands += [w_p, b_p]
        # Constant index_map -> fetched once, VMEM-resident across the grid.
        in_specs += [pl.BlockSpec((d_in_p, d_out_p), lambda i: (0, 0)),
                     pl.BlockSpec((1, d_out_p), lambda i: (0, 0))]
        d_in, d_in_p = d_out, d_out_p

    # Output layer weight as a (1, H_pad) row; scalar bias as (1, 1).
    w_out_p = jnp.zeros((1, d_in_p), matmul_dtype).at[0, :d_in].set(
        w_out.reshape(d_in).astype(matmul_dtype))
    b_out_p = jnp.asarray(b_out, jnp.float32).reshape(1, 1)
    operands += [w_out_p, b_out_p]
    in_specs += [pl.BlockSpec((1, d_in_p), lambda i: (0, 0)),
                 pl.BlockSpec((1, 1), lambda i: (0, 0))]

    out = pl.pallas_call(
        _make_mlp_kernel(num_hidden),
        out_shape=jax.ShapeDtypeStruct((1, b_pad), jnp.float32),
        grid=(num_tiles,),
        in_specs=in_specs,
        # Lane-dense output slab: batch lives on the lane axis of row 0.
        out_specs=pl.BlockSpec((1, tile_b), lambda i: (0, i)),
        compiler_params=pltpu.CompilerParams(
            # Batch tiles are independent -> shard across TensorCores (v7x has
            # 2 TCs) and let the x-tile DMA double-buffer behind the matmuls.
            dimension_semantics=("parallel",),
            # Explicit budget; safely within v5e/v6e/v7x scoped VMEM.
            vmem_limit_bytes=32 * 1024 * 1024,
        ),
    )(*operands)

    return out[0, :B].reshape(B, 1)


def init_mlp_params(key, in_size, hidden_sizes):
    """Deterministic init mimicking nn.Linear's uniform(-1/sqrt(fan_in), 1/sqrt(fan_in))."""
    assert isinstance(hidden_sizes, collections_abc.Iterable)
    dims = [in_size] + list(hidden_sizes) + [1]   # fc layers ... + fc2 (out=1)
    params = []
    for d_in, d_out in zip(dims[:-1], dims[1:]):
        key, kw, kb = jax.random.split(key, 3)
        bound = 1.0 / jnp.sqrt(jnp.float32(d_in))
        w = jax.random.uniform(kw, (d_in, d_out), jnp.float32, -bound, bound)
        b = jax.random.uniform(kb, (1, d_out), jnp.float32, -bound, bound)
        params.append((w, b))
    return params


def mlp_reference(x, params, matmul_dtype=jnp.bfloat16):
    """Pure-JAX reference with the same dtype policy as the kernel
    (bf16 matmul inputs, f32 accumulation, f32 bias + ReLU)."""
    h = x.astype(jnp.float32)
    for w, b in params[:-1]:
        h = jnp.dot(h.astype(matmul_dtype), w.astype(matmul_dtype),
                    preferred_element_type=jnp.float32)
        h = jnp.maximum(h + b.astype(jnp.float32), 0.0)
    w, b = params[-1]
    y = jnp.dot(h.astype(matmul_dtype), w.astype(matmul_dtype),
                preferred_element_type=jnp.float32)
    return y + b.astype(jnp.float32)


if __name__ == "__main__":
    key = jax.random.PRNGKey(0)
    batch, in_size, hidden_sizes = 8, 16, (32, 32)

    key, kx = jax.random.split(key)
    x = jax.random.normal(kx, (batch, in_size), jnp.float32)

    params = init_mlp_params(key, in_size, hidden_sizes)

    out = mlp_forward(x, params)
    out = jax.block_until_ready(out)

    ref = mlp_reference(x, params)
    assert out.shape == (batch, 1)
    assert jnp.allclose(out, ref, atol=1e-4, rtol=1e-4), "mismatch vs reference"

    print("KERNEL_OK")
</pallas_src>

<mosaic_0001>
module attributes {stable_mosaic.version = 11 : i64} {
  func.func @kernel(%arg0: i32, %arg1: memref<128x128xbf16, #tpu.memory_space<vmem>>, %arg2: memref<128x128xbf16, #tpu.memory_space<vmem>>, %arg3: memref<1x128xf32, #tpu.memory_space<vmem>>, %arg4: memref<128x128xbf16, #tpu.memory_space<vmem>>, %arg5: memref<1x128xf32, #tpu.memory_space<vmem>>, %arg6: memref<1x128xbf16, #tpu.memory_space<vmem>>, %arg7: memref<1x1xf32, #tpu.memory_space<vmem>>, %arg8: memref<1x128xf32, #tpu.memory_space<vmem>>) attributes {dimension_semantics = [#tpu.dimension_semantics<parallel>], iteration_bounds = array<i64: 1>, scalar_prefetch = 0 : i64, scratch_operands = 0 : i64, tpu.core_type = #tpu.core_type<tc>, window_params = [{transform_indices = @transform_0, window_bounds = array<i64: 128, 128>}, {pipeline_mode = #tpu.pipeline_mode<synchronous>, transform_indices = @transform_1, window_bounds = array<i64: 128, 128>}, {pipeline_mode = #tpu.pipeline_mode<synchronous>, transform_indices = @transform_2, window_bounds = array<i64: 1, 128>}, {pipeline_mode = #tpu.pipeline_mode<synchronous>, transform_indices = @transform_3, window_bounds = array<i64: 128, 128>}, {pipeline_mode = #tpu.pipeline_mode<synchronous>, transform_indices = @transform_4, window_bounds = array<i64: 1, 128>}, {pipeline_mode = #tpu.pipeline_mode<synchronous>, transform_indices = @transform_5, window_bounds = array<i64: 1, 128>}, {pipeline_mode = #tpu.pipeline_mode<synchronous>, transform_indices = @transform_6, window_bounds = array<i64: 1, 1>}, {transform_indices = @transform_7, window_bounds = array<i64: 1, 128>}]} {
    %c0 = arith.constant 0 : index
    %c0_0 = arith.constant 0 : index
    %0 = vector.load %arg1[%c0, %c0_0] : memref<128x128xbf16, #tpu.memory_space<vmem>>, vector<128x128xbf16>
    %c0_1 = arith.constant 0 : index
    %c0_2 = arith.constant 0 : index
    %1 = vector.load %arg2[%c0_1, %c0_2] : memref<128x128xbf16, #tpu.memory_space<vmem>>, vector<128x128xbf16>
    %cst = arith.constant dense<0.000000e+00> : vector<128x128xf32>
    %2 = tpu.matmul %0, %1, %cst {dimension_numbers = #tpu.dot_dimension_numbers<[1], [0], [0], [1], [0, 0, 1, 1], [], []>} : vector<128x128xbf16>, vector<128x128xbf16>, vector<128x128xf32> -> vector<128x128xf32>
    %c0_3 = arith.constant 0 : index
    %c0_4 = arith.constant 0 : index
    %3 = vector.load %arg3[%c0_3, %c0_4] : memref<1x128xf32, #tpu.memory_space<vmem>>, vector<1x128xf32>
    %4 = vector.broadcast %3 : vector<1x128xf32> to vector<128x128xf32>
    %5 = arith.addf %2, %4 : vector<128x128xf32>
    %cst_5 = arith.constant 0.000000e+00 : f32
    %6 = vector.broadcast %cst_5 : f32 to vector<128x128xf32>
    %7 = arith.maximumf %5, %6 : vector<128x128xf32>
    %8 = arith.truncf %7 : vector<128x128xf32> to vector<128x128xbf16>
    %c0_6 = arith.constant 0 : index
    %c0_7 = arith.constant 0 : index
    %9 = vector.load %arg4[%c0_6, %c0_7] : memref<128x128xbf16, #tpu.memory_space<vmem>>, vector<128x128xbf16>
    %cst_8 = arith.constant dense<0.000000e+00> : vector<128x128xf32>
    %10 = tpu.matmul %8, %9, %cst_8 {dimension_numbers = #tpu.dot_dimension_numbers<[1], [0], [0], [1], [0, 0, 1, 1], [], []>} : vector<128x128xbf16>, vector<128x128xbf16>, vector<128x128xf32> -> vector<128x128xf32>
    %c0_9 = arith.constant 0 : index
    %c0_10 = arith.constant 0 : index
    %11 = vector.load %arg5[%c0_9, %c0_10] : memref<1x128xf32, #tpu.memory_space<vmem>>, vector<1x128xf32>
    %12 = vector.broadcast %11 : vector<1x128xf32> to vector<128x128xf32>
    %13 = arith.addf %10, %12 : vector<128x128xf32>
    %cst_11 = arith.constant 0.000000e+00 : f32
    %14 = vector.broadcast %cst_11 : f32 to vector<128x128xf32>
    %15 = arith.maximumf %13, %14 : vector<128x128xf32>
    %c0_12 = arith.constant 0 : index
    %c0_13 = arith.constant 0 : index
    %16 = vector.load %arg6[%c0_12, %c0_13] : memref<1x128xbf16, #tpu.memory_space<vmem>>, vector<1x128xbf16>
    %17 = arith.truncf %15 : vector<128x128xf32> to vector<128x128xbf16>
    %18 = tpu.transpose %17, [1, 0] : vector<128x128xbf16> -> vector<128x128xbf16>
    %cst_14 = arith.constant dense<0.000000e+00> : vector<1x128xf32>
    %19 = tpu.matmul %16, %18, %cst_14 {dimension_numbers = #tpu.dot_dimension_numbers<[1], [0], [0], [1], [0, 0, 1, 1], [], []>} : vector<1x128xbf16>, vector<128x128xbf16>, vector<1x128xf32> -> vector<1x128xf32>
    %c0_15 = arith.constant 0 : index
    %c0_16 = arith.constant 0 : index
    %20 = vector.load %arg7[%c0_15, %c0_16] : memref<1x1xf32, #tpu.memory_space<vmem>>, vector<1x1xf32>
    %21 = vector.broadcast %20 : vector<1x1xf32> to vector<1x128xf32>
    %22 = arith.addf %19, %21 : vector<1x128xf32>
    %c0_17 = arith.constant 0 : index
    %c0_18 = arith.constant 0 : index
    %23 = vector.load %arg8[%c0_17, %c0_18] : memref<1x128xf32, #tpu.memory_space<vmem>>, vector<1x128xf32>
    tpu.vector_store %arg8[%c0_17, %c0_18], %22 {strides = array<i32>} : memref<1x128xf32, #tpu.memory_space<vmem>>, vector<1x128xf32>,
    return
  }
  func.func @transform_0(%arg0: i32) -> (i32, i32) {
    %c0_i32 = arith.constant 0 : i32
    %c0_i32_0 = arith.constant 0 : i32
    return %arg0, %c0_i32 : i32, i32
  }
  func.func @transform_1(%arg0: i32) -> (i32, i32) {
    %c0_i32 = arith.constant 0 : i32
    %c0_i32_0 = arith.constant 0 : i32
    %c0_i32_1 = arith.constant 0 : i32
    return %c0_i32, %c0_i32_0 : i32, i32
  }
  func.func @transform_2(%arg0: i32) -> (i32, i32) {
    %c0_i32 = arith.constant 0 : i32
    %c0_i32_0 = arith.constant 0 : i32
    %c0_i32_1 = arith.constant 0 : i32
    return %c0_i32, %c0_i32_0 : i32, i32
  }
  func.func @transform_3(%arg0: i32) -> (i32, i32) {
    %c0_i32 = arith.constant 0 : i32
    %c0_i32_0 = arith.constant 0 : i32
    %c0_i32_1 = arith.constant 0 : i32
    return %c0_i32, %c0_i32_0 : i32, i32
  }
  func.func @transform_4(%arg0: i32) -> (i32, i32) {
    %c0_i32 = arith.constant 0 : i32
    %c0_i32_0 = arith.constant 0 : i32
    %c0_i32_1 = arith.constant 0 : i32
    return %c0_i32, %c0_i32_0 : i32, i32
  }
  func.func @transform_5(%arg0: i32) -> (i32, i32) {
    %c0_i32 = arith.constant 0 : i32
    %c0_i32_0 = arith.constant 0 : i32
    %c0_i32_1 = arith.constant 0 : i32
    return %c0_i32, %c0_i32_0 : i32, i32
  }
  func.func @transform_6(%arg0: i32) -> (i32, i32) {
    %c0_i32 = arith.constant 0 : i32
    %c0_i32_0 = arith.constant 0 : i32
    %c0_i32_1 = arith.constant 0 : i32
    return %c0_i32, %c0_i32_0 : i32, i32
  }
  func.func @transform_7(%arg0: i32) -> (i32, i32) {
    %c0_i32 = arith.constant 0 : i32
    %c0_i32_0 = arith.constant 0 : i32
    return %c0_i32, %arg0 : i32, i32
  }
}

</mosaic_0001>

<llo_original>
// kernel: tpu_custom_call.1
$region0: #{tpu_custom_call.1}
  #allocation0 [shape = 'u32[]', space=smem, size = 0x4, offset = 0x4, fixed_abs, tag = 'smem constant byte address 0x4 - core index']
  #allocation1 [shape = 'u32[144,128]{1,0:T(1,128)}', space=vmem, size = 0x12000, scoped, tag = 'internal scratch']
  #allocation2 [shape = 'f32[1,1]{1,0:T(1,128)S(1)}', space=vmem, size = 0x200, scoped, tag = 'scoped memory for tpu_custom_call.1']
  %s0 = inlined_call_operand.hbm [shape: bf16[128,128], index: 0, kind: input, shape index: {}]
  %s1 = inlined_call_operand.hbm [shape: bf16[128,128], index: 1, kind: input, shape index: {}]
  %s2 = inlined_call_operand.vmem [shape: f32[1,128], index: 2, kind: input, shape index: {}]
  %s3 = inlined_call_operand.hbm [shape: bf16[128,128], index: 3, kind: input, shape index: {}]
  %s4 = inlined_call_operand.vmem [shape: f32[1,128], index: 4, kind: input, shape index: {}]
  %s5 = inlined_call_operand.vmem [shape: bf16[1,128], index: 5, kind: input, shape index: {}]
  %s6 = inlined_call_operand.<no memory space> [shape: f32[1,1], index: 6, kind: input, shape index: {}]
  %s7 = inlined_call_operand.hbm [shape: f32[1,128], index: 7, kind: output, shape index: {}]
  %s8 = sld [smem:[#allocation0]]
  $region50: #{tpu_custom_call.1} parent=0
    _
  %s10 = ssub.s32 1, %s8
  %s11 = scalar_select 0, %s10, %s8
  %v12 = vstv %s6
  %13 = vst [vmem:[#allocation2] sm:$0x1] %v12
  $region1: #{tpu_custom_call.1} parent=0
    #allocation3 [shape = 'u8[32768]{0}', space=vmem, size = 0x8000, scoped, tag = 'input window, operand 0, single buffered']
    #allocation4 [shape = 's32[1]{0}', space=sflag, size = 0x4, scoped, tag = 'scoped memory for tpu_custom_call.1']
    #allocation5 [shape = 's32[1]{0}', space=sflag, size = 0x4, scoped, tag = 'scoped memory for tpu_custom_call.1']
    #allocation6 [shape = 'u8[32768]{0}', space=vmem, size = 0x8000, scoped, tag = 'input window, operand 1, single buffered']
    #allocation7 [shape = 's32[1]{0}', space=sflag, size = 0x4, scoped, tag = 'scoped memory for tpu_custom_call.1']
    #allocation8 [shape = 'u8[32768]{0}', space=vmem, size = 0x8000, scoped, tag = 'input window, operand 3, single buffered']
    #allocation9 [shape = 'u8[512]{0}', space=vmem, size = 0x400, scoped, tag = 'output window, operand 0, single buffered']
    %14 = vsyncpa [#allocation4], 0
    %15 = vsyncpa [#allocation7], 0
    %16 = vsyncpa [#allocation5], 0
    // Predicated region
    $region2: #{tpu_custom_call.1} parent=1 // pred_check
      _
    $region3: #{tpu_custom_call.1} parent=1 // pred_check_branch
      %18 = sbr.rel (0) target = $region5
    $region4: #{tpu_custom_call.1} parent=1 // pred_region
      %s20 = ssub.s32 1024, 1024
      %21 = vsyncadd [#allocation4], %s20
      %s22 = sshll.u32 [#allocation3], 4
      %s23 = int_to_ptr.vmem [resolvable:$true] %s22
      %28 = dma.hbm_to_vmem [thread:$0]  %s0, 1024, %s23, [#allocation4], 64, 64, 4
    $region5: #{tpu_custom_call.1} parent=1 // pred_fallthru
      _
    // Predicated region
    $region6: #{tpu_custom_call.1} parent=1 // pred_check
      _
    $region7: #{tpu_custom_call.1} parent=1 // pred_check_branch
      %30 = sbr.rel (0) target = $region9
    $region8: #{tpu_custom_call.1} parent=1 // pred_region
      %s32 = ssub.s32 1024, 1024
      %33 = vsyncadd [#allocation7], %s32
      %s34 = sshll.u32 [#allocation6], 4
      %s35 = int_to_ptr.vmem [resolvable:$true] %s34
      %40 = dma.hbm_to_vmem [thread:$0]  %s1, 1024, %s35, [#allocation7], 64, 64, 4
    $region9: #{tpu_custom_call.1} parent=1 // pred_fallthru
      _
    // Predicated region
    $region10: #{tpu_custom_call.1} parent=1 // pred_check
      _
    $region11: #{tpu_custom_call.1} parent=1 // pred_check_branch
      %42 = sbr.rel (0) target = $region13
    $region12: #{tpu_custom_call.1} parent=1 // pred_region
      _
    $region13: #{tpu_custom_call.1} parent=1 // pred_fallthru
      _
    // Predicated region
    $region14: #{tpu_custom_call.1} parent=1 // pred_check
      _
    $region15: #{tpu_custom_call.1} parent=1 // pred_check_branch
      %44 = sbr.rel (0) target = $region17
    $region16: #{tpu_custom_call.1} parent=1 // pred_region
      %s46 = ssub.s32 1024, 1024
      %47 = vsyncadd [#allocation7], %s46
      %s48 = sshll.u32 [#allocation8], 4
      %s49 = int_to_ptr.vmem [resolvable:$true] %s48
      %54 = dma.hbm_to_vmem [thread:$0]  %s3, 1024, %s49, [#allocation7], 64, 64, 4
    $region17: #{tpu_custom_call.1} parent=1 // pred_fallthru
      _
    // Predicated region
    $region18: #{tpu_custom_call.1} parent=1 // pred_check
      _
    $region19: #{tpu_custom_call.1} parent=1 // pred_check_branch
      %56 = sbr.rel (0) target = $region21
    $region20: #{tpu_custom_call.1} parent=1 // pred_region
      _
    $region21: #{tpu_custom_call.1} parent=1 // pred_fallthru
      _
    // Predicated region
    $region22: #{tpu_custom_call.1} parent=1 // pred_check
      _
    $region23: #{tpu_custom_call.1} parent=1 // pred_check_branch
      %58 = sbr.rel (0) target = $region25
    $region24: #{tpu_custom_call.1} parent=1 // pred_region
      _
    $region25: #{tpu_custom_call.1} parent=1 // pred_fallthru
      _
    // Predicated region
    $region26: #{tpu_custom_call.1} parent=1 // pred_check
      _
    $region27: #{tpu_custom_call.1} parent=1 // pred_check_branch
      %60 = sbr.rel (0) target = $region29
    $region28: #{tpu_custom_call.1} parent=1 // pred_region
      _
    $region29: #{tpu_custom_call.1} parent=1 // pred_fallthru
      _
    // Predicated region
    $region30: #{tpu_custom_call.1} parent=1 // pred_check
      _
    $region31: #{tpu_custom_call.1} parent=1 // pred_check_branch
      %62 = sbr.rel (0) target = $region33
    $region32: #{tpu_custom_call.1} parent=1 // pred_region
      %63 = dma.done [#allocation4], 1024
    $region33: #{tpu_custom_call.1} parent=1 // pred_fallthru
      _
    // Predicated region
    $region34: #{tpu_custom_call.1} parent=1 // pred_check
      _
    $region35: #{tpu_custom_call.1} parent=1 // pred_check_branch
      %65 = sbr.rel (0) target = $region37
    $region36: #{tpu_custom_call.1} parent=1 // pred_region
      %66 = dma.done [#allocation7], 1024
    $region37: #{tpu_custom_call.1} parent=1 // pred_fallthru
      _
    // Predicated region
    $region38: #{tpu_custom_call.1} parent=1 // pred_check
      _
    $region39: #{tpu_custom_call.1} parent=1 // pred_check_branch
      %68 = sbr.rel (0) target = $region41
    $region40: #{tpu_custom_call.1} parent=1 // pred_region
      %69 = dma.done [#allocation7], 1024
    $region41: #{tpu_custom_call.1} parent=1 // pred_fallthru
      _
    %v71 = vld [vmem:[#allocation3] sm:$0xf]
    %v72 = vld [vmem:[#allocation3 + $0x4] sm:$0xf]
    %v73 = vld [vmem:[#allocation3 + $0x8] sm:$0xf]
    %v74 = vld [vmem:[#allocation3 + $0xc] sm:$0xf]
    %v75 = vld [vmem:[#allocation3 + $0x10] sm:$0xf]
    %v76 = vld [vmem:[#allocation3 + $0x14] sm:$0xf]
    %v77 = vld [vmem:[#allocation3 + $0x18] sm:$0xf]
    %v78 = vld [vmem:[#allocation3 + $0x1c] sm:$0xf]
    %v79 = vld [vmem:[#allocation3 + $0x20] sm:$0xf]
    %v80 = vld [vmem:[#allocation3 + $0x24] sm:$0xf]
    %v81 = vld [vmem:[#allocation3 + $0x28] sm:$0xf]
    %v82 = vld [vmem:[#allocation3 + $0x2c] sm:$0xf]
    %v83 = vld [vmem:[#allocation3 + $0x30] sm:$0xf]
    %v84 = vld [vmem:[#allocation3 + $0x34] sm:$0xf]
    %v85 = vld [vmem:[#allocation3 + $0x38] sm:$0xf]
    %v86 = vld [vmem:[#allocation3 + $0x3c] sm:$0xf]
    %v87 = vld [vmem:[#allocation6] sm:$0xf]
    %v88 = vld [vmem:[#allocation6 + $0x4] sm:$0xf]
    %v89 = vld [vmem:[#allocation6 + $0x8] sm:$0xf]
    %v90 = vld [vmem:[#allocation6 + $0xc] sm:$0xf]
    %v91 = vld [vmem:[#allocation6 + $0x10] sm:$0xf]
    %v92 = vld [vmem:[#allocation6 + $0x14] sm:$0xf]
    %v93 = vld [vmem:[#allocation6 + $0x18] sm:$0xf]
    %v94 = vld [vmem:[#allocation6 + $0x1c] sm:$0xf]
    %v95 = vld [vmem:[#allocation6 + $0x20] sm:$0xf]
    %v96 = vld [vmem:[#allocation6 + $0x24] sm:$0xf]
    %v97 = vld [vmem:[#allocation6 + $0x28] sm:$0xf]
    %v98 = vld [vmem:[#allocation6 + $0x2c] sm:$0xf]
    %v99 = vld [vmem:[#allocation6 + $0x30] sm:$0xf]
    %v100 = vld [vmem:[#allocation6 + $0x34] sm:$0xf]
    %v101 = vld [vmem:[#allocation6 + $0x38] sm:$0xf]
    %v102 = vld [vmem:[#allocation6 + $0x3c] sm:$0xf]
    %v103 = vld [vmem:[%s2] sm:$0x1]
    %v105 = vlaneseq
    %v106 = vshrl.u32 %v105, 7
    %v107 = vsub.s32 0, %v106
    %v108 = vrot.slane %v103, %v107
    %v126 = vunpack.c.l.b16 %v71
    %v127 = vunpack.c.l.b16 %v72
    %v128 = vunpack.c.l.b16 %v73
    %v129 = vunpack.c.l.b16 %v74
    %v130 = vunpack.c.l.b16 %v75
    %v131 = vunpack.c.l.b16 %v76
    %v132 = vunpack.c.l.b16 %v77
    %v133 = vunpack.c.l.b16 %v78
    %v134 = vunpack.c.l.b16 %v79
    %v135 = vunpack.c.l.b16 %v80
    %v136 = vunpack.c.l.b16 %v81
    %v137 = vunpack.c.l.b16 %v82
    %v138 = vunpack.c.l.b16 %v83
    %v139 = vunpack.c.l.b16 %v84
    %v140 = vunpack.c.l.b16 %v85
    %v141 = vunpack.c.l.b16 %v86
    %v142 = vpack.c.b16 %v127, %v126
    %v143 = vpack.c.b16 %v129, %v128
    %v144 = vpack.c.b16 %v131, %v130
    %v145 = vpack.c.b16 %v133, %v132
    %v146 = vpack.c.b16 %v135, %v134
    %v147 = vpack.c.b16 %v137, %v136
    %v148 = vpack.c.b16 %v139, %v138
    %v149 = vpack.c.b16 %v141, %v140
    %v174 = vunpack.c.l.b16 %v87
    %v175 = vunpack.c.l.b16 %v88
    %v176 = vunpack.c.l.b16 %v89
    %v177 = vunpack.c.l.b16 %v90
    %v178 = vunpack.c.l.b16 %v91
    %v179 = vunpack.c.l.b16 %v92
    %v180 = vunpack.c.l.b16 %v93
    %v181 = vunpack.c.l.b16 %v94
    %v182 = vunpack.c.l.b16 %v95
    %v183 = vunpack.c.l.b16 %v96
    %v184 = vunpack.c.l.b16 %v97
    %v185 = vunpack.c.l.b16 %v98
    %v186 = vunpack.c.l.b16 %v99
    %v187 = vunpack.c.l.b16 %v100
    %v188 = vunpack.c.l.b16 %v101
    %v189 = vunpack.c.l.b16 %v102
    %v190 = vpack.c.b16 %v175, %v174
    %v191 = vpack.c.b16 %v177, %v176
    %v192 = vpack.c.b16 %v179, %v178
    %v193 = vpack.c.b16 %v181, %v180
    %v194 = vpack.c.b16 %v183, %v182
    %v195 = vpack.c.b16 %v185, %v184
    %v196 = vpack.c.b16 %v187, %v186
    %v197 = vpack.c.b16 %v189, %v188
    %206 = vmatprep.subr.bf16.mxu0 0
    %207 = vmatpush1.bf16.msra.mxu0 %v197
    %208 = vmatprep.subr.bf16.mxu0 0
    %209 = vmatpush1.bf16.msra.mxu0 %v196
    %210 = vmatprep.subr.bf16.mxu0 0
    %211 = vmatpush1.bf16.msra.mxu0 %v195
    %212 = vmatprep.subr.bf16.mxu0 0
    %213 = vmatpush1.bf16.msra.mxu0 %v194
    %214 = vmatprep.subr.bf16.mxu0 0
    %215 = vmatpush1.bf16.msra.mxu0 %v193
    %216 = vmatprep.subr.bf16.mxu0 0
    %217 = vmatpush1.bf16.msra.mxu0 %v192
    %218 = vmatprep.subr.bf16.mxu0 0
    %219 = vmatpush1.bf16.msra.mxu0 %v191
    %220 = vmatprep.subr.bf16.mxu0 0
    %221 = vmatpush1.bf16.msra.mxu0 %v190
    %222 = vmatprep.subr.bf16.mxu0 0
    %223 = vmatpush2.bf16.msra.mxu0 0
    %224 = vmatprep.subr.bf16.mxu0 0
    %225 = vmatpush2.bf16.msra.mxu0 0
    %226 = vmatprep.subr.bf16.mxu0 0
    %227 = vmatpush2.bf16.msra.mxu0 0
    %228 = vmatprep.subr.bf16.mxu0 0
    %229 = vmatpush2.bf16.msra.mxu0 0
    %230 = vmatprep.subr.bf16.mxu0 0
    %231 = vmatpush2.bf16.msra.mxu0 0
    %232 = vmatprep.subr.bf16.mxu0 0
    %233 = vmatpush2.bf16.msra.mxu0 0
    %234 = vmatprep.subr.bf16.mxu0 0
    %235 = vmatpush2.bf16.msra.mxu0 0
    %236 = vmatprep.subr.bf16.mxu0 0
    %237 = vmatpush2.bf16.msra.mxu0 0
    %238 = vmatprep.mubr.bf16.mxu0 0
    %239 = vmatmul.mubr.bf16.gmra.mxu0 %v142
    %v240 = vpop.f32.mrf.mxu0
    %v241 = vadd.f32 %v108, %v240
    %v242 = vpop.f32.mrf.mxu0
    %v243 = vpop.f32.mrf.mxu0
    %v244 = vadd.f32 %v108, %v243
    %v245 = vpop.f32.mrf.mxu0
    %246 = vmatprep.mubr.bf16.mxu0 0
    %247 = vmatmul.mubr.bf16.gmra.mxu0 %v143
    %v248 = vpop.f32.mrf.mxu0
    %v249 = vadd.f32 %v108, %v248
    %v250 = vpop.f32.mrf.mxu0
    %v251 = vpop.f32.mrf.mxu0
    %v252 = vadd.f32 %v108, %v251
    %v253 = vpop.f32.mrf.mxu0
    %254 = vmatprep.mubr.bf16.mxu0 0
    %255 = vmatmul.mubr.bf16.gmra.mxu0 %v144
    %v256 = vpop.f32.mrf.mxu0
    %v257 = vadd.f32 %v108, %v256
    %v258 = vpop.f32.mrf.mxu0
    %v259 = vpop.f32.mrf.mxu0
    %v260 = vadd.f32 %v108, %v259
    %v261 = vpop.f32.mrf.mxu0
    %262 = vmatprep.mubr.bf16.mxu0 0
    %263 = vmatmul.mubr.bf16.gmra.mxu0 %v145
    %v264 = vpop.f32.mrf.mxu0
    %v265 = vadd.f32 %v108, %v264
    %v266 = vpop.f32.mrf.mxu0
    %v267 = vpop.f32.mrf.mxu0
    %v268 = vadd.f32 %v108, %v267
    %v269 = vpop.f32.mrf.mxu0
    %270 = vmatprep.mubr.bf16.mxu0 0
    %271 = vmatmul.mubr.bf16.gmra.mxu0 %v146
    %v272 = vpop.f32.mrf.mxu0
    %v273 = vadd.f32 %v108, %v272
    %v274 = vpop.f32.mrf.mxu0
    %v275 = vpop.f32.mrf.mxu0
    %v276 = vadd.f32 %v108, %v275
    %v277 = vpop.f32.mrf.mxu0
    %278 = vmatprep.mubr.bf16.mxu0 0
    %279 = vmatmul.mubr.bf16.gmra.mxu0 %v147
    %v280 = vpop.f32.mrf.mxu0
    %v281 = vadd.f32 %v108, %v280
    %v282 = vpop.f32.mrf.mxu0
    %v283 = vpop.f32.mrf.mxu0
    %v284 = vadd.f32 %v108, %v283
    %v285 = vpop.f32.mrf.mxu0
    %286 = vmatprep.mubr.bf16.mxu0 0
    %287 = vmatmul.mubr.bf16.gmra.mxu0 %v148
    %v288 = vpop.f32.mrf.mxu0
    %v289 = vadd.f32 %v108, %v288
    %v290 = vpop.f32.mrf.mxu0
    %v291 = vpop.f32.mrf.mxu0
    %v292 = vadd.f32 %v108, %v291
    %v293 = vpop.f32.mrf.mxu0
    %294 = vmatprep.mubr.bf16.mxu0 0
    %295 = vmatmul.mubr.bf16.gmra.mxu0 %v149
    %v296 = vpop.f32.mrf.mxu0
    %v297 = vadd.f32 %v108, %v296
    %v298 = vpop.f32.mrf.mxu0
    %v299 = vpop.f32.mrf.mxu0
    %v300 = vadd.f32 %v108, %v299
    %v301 = vpop.f32.mrf.mxu0
    %302 = vdwg.mxu0
    %v303 = vmax.f32 %v241, 0.0
    %v304 = vmax.f32 %v244, 0.0
    %v305 = vmax.f32 %v249, 0.0
    %v306 = vmax.f32 %v252, 0.0
    %v307 = vmax.f32 %v257, 0.0
    %v308 = vmax.f32 %v260, 0.0
    %v309 = vmax.f32 %v265, 0.0
    %v310 = vmax.f32 %v268, 0.0
    %v311 = vmax.f32 %v273, 0.0
    %v312 = vmax.f32 %v276, 0.0
    %v313 = vmax.f32 %v281, 0.0
    %v314 = vmax.f32 %v284, 0.0
    %v315 = vmax.f32 %v289, 0.0
    %v316 = vmax.f32 %v292, 0.0
    %v317 = vmax.f32 %v297, 0.0
    %v318 = vmax.f32 %v300, 0.0
    %v319 = vpack.c.bf16 %v304, %v303
    %v320 = vpack.c.bf16 %v306, %v305
    %v321 = vpack.c.bf16 %v308, %v307
    %v322 = vpack.c.bf16 %v310, %v309
    %v323 = vpack.c.bf16 %v312, %v311
    %v324 = vpack.c.bf16 %v314, %v313
    %v325 = vpack.c.bf16 %v316, %v315
    %v326 = vpack.c.bf16 %v318, %v317
    %v327 = vld [vmem:[#allocation8] sm:$0xf]
    %v328 = vld [vmem:[#allocation8 + $0x4] sm:$0xf]
    %v329 = vld [vmem:[#allocation8 + $0x8] sm:$0xf]
    %v330 = vld [vmem:[#allocation8 + $0xc] sm:$0xf]
    %v331 = vld [vmem:[#allocation8 + $0x10] sm:$0xf]
    %v332 = vld [vmem:[#allocation8 + $0x14] sm:$0xf]
    %v333 = vld [vmem:[#allocation8 + $0x18] sm:$0xf]
    %v334 = vld [vmem:[#allocation8 + $0x1c] sm:$0xf]
    %v335 = vld [vmem:[#allocation8 + $0x20] sm:$0xf]
    %v336 = vld [vmem:[#allocation8 + $0x24] sm:$0xf]
    %v337 = vld [vmem:[#allocation8 + $0x28] sm:$0xf]
    %v338 = vld [vmem:[#allocation8 + $0x2c] sm:$0xf]
    %v339 = vld [vmem:[#allocation8 + $0x30] sm:$0xf]
    %v340 = vld [vmem:[#allocation8 + $0x34] sm:$0xf]
    %v341 = vld [vmem:[#allocation8 + $0x38] sm:$0xf]
    %v342 = vld [vmem:[#allocation8 + $0x3c] sm:$0xf]
    %v343 = vld [vmem:[%s4] sm:$0x1]
    %v345 = vlaneseq
    %v346 = vshrl.u32 %v345, 7
    %v347 = vsub.s32 0, %v346
    %v348 = vrot.slane %v343, %v347
    %v366 = vunpack.c.l.b16 %v327
    %v367 = vunpack.c.l.b16 %v328
    %v368 = vunpack.c.l.b16 %v329
    %v369 = vunpack.c.l.b16 %v330
    %v370 = vunpack.c.l.b16 %v331
    %v371 = vunpack.c.l.b16 %v332
    %v372 = vunpack.c.l.b16 %v333
    %v373 = vunpack.c.l.b16 %v334
    %v374 = vunpack.c.l.b16 %v335
    %v375 = vunpack.c.l.b16 %v336
    %v376 = vunpack.c.l.b16 %v337
    %v377 = vunpack.c.l.b16 %v338
    %v378 = vunpack.c.l.b16 %v339
    %v379 = vunpack.c.l.b16 %v340
    %v380 = vunpack.c.l.b16 %v341
    %v381 = vunpack.c.l.b16 %v342
    %v382 = vpack.c.b16 %v367, %v366
    %v383 = vpack.c.b16 %v369, %v368
    %v384 = vpack.c.b16 %v371, %v370
    %v385 = vpack.c.b16 %v373, %v372
    %v386 = vpack.c.b16 %v375, %v374
    %v387 = vpack.c.b16 %v377, %v376
    %v388 = vpack.c.b16 %v379, %v378
    %v389 = vpack.c.b16 %v381, %v380
    %398 = vmatprep.subr.bf16.mxu0 0
    %399 = vmatpush1.bf16.msra.mxu0 %v389
    %400 = vmatprep.subr.bf16.mxu0 0
    %401 = vmatpush1.bf16.msra.mxu0 %v388
    %402 = vmatprep.subr.bf16.mxu0 0
    %403 = vmatpush1.bf16.msra.mxu0 %v387
    %404 = vmatprep.subr.bf16.mxu0 0
    %405 = vmatpush1.bf16.msra.mxu0 %v386
    %406 = vmatprep.subr.bf16.mxu0 0
    %407 = vmatpush1.bf16.msra.mxu0 %v385
    %408 = vmatprep.subr.bf16.mxu0 0
    %409 = vmatpush1.bf16.msra.mxu0 %v384
    %410 = vmatprep.subr.bf16.mxu0 0
    %411 = vmatpush1.bf16.msra.mxu0 %v383
    %412 = vmatprep.subr.bf16.mxu0 0
    %413 = vmatpush1.bf16.msra.mxu0 %v382
    %414 = vmatprep.subr.bf16.mxu0 0
    %415 = vmatpush2.bf16.msra.mxu0 0
    %416 = vmatprep.subr.bf16.mxu0 0
    %417 = vmatpush2.bf16.msra.mxu0 0
    %418 = vmatprep.subr.bf16.mxu0 0
    %419 = vmatpush2.bf16.msra.mxu0 0
    %420 = vmatprep.subr.bf16.mxu0 0
    %421 = vmatpush2.bf16.msra.mxu0 0
    %422 = vmatprep.subr.bf16.mxu0 0
    %423 = vmatpush2.bf16.msra.mxu0 0
    %424 = vmatprep.subr.bf16.mxu0 0
    %425 = vmatpush2.bf16.msra.mxu0 0
    %426 = vmatprep.subr.bf16.mxu0 0
    %427 = vmatpush2.bf16.msra.mxu0 0
    %428 = vmatprep.subr.bf16.mxu0 0
    %429 = vmatpush2.bf16.msra.mxu0 0
    %430 = vmatprep.mubr.bf16.mxu0 0
    %431 = vmatmul.mubr.bf16.gmra.mxu0 %v319
    %v432 = vpop.f32.mrf.mxu0
    %v433 = vadd.f32 %v348, %v432
    %v434 = vpop.f32.mrf.mxu0
    %v435 = vpop.f32.mrf.mxu0
    %v436 = vadd.f32 %v348, %v435
    %v437 = vpop.f32.mrf.mxu0
    %438 = vmatprep.mubr.bf16.mxu0 0
    %439 = vmatmul.mubr.bf16.gmra.mxu0 %v320
    %v440 = vpop.f32.mrf.mxu0
    %v441 = vadd.f32 %v348, %v440
    %v442 = vpop.f32.mrf.mxu0
    %v443 = vpop.f32.mrf.mxu0
    %v444 = vadd.f32 %v348, %v443
    %v445 = vpop.f32.mrf.mxu0
    %446 = vmatprep.mubr.bf16.mxu0 0
    %447 = vmatmul.mubr.bf16.gmra.mxu0 %v321
    %v448 = vpop.f32.mrf.mxu0
    %v449 = vadd.f32 %v348, %v448
    %v450 = vpop.f32.mrf.mxu0
    %v451 = vpop.f32.mrf.mxu0
    %v452 = vadd.f32 %v348, %v451
    %v453 = vpop.f32.mrf.mxu0
    %454 = vmatprep.mubr.bf16.mxu0 0
    %455 = vmatmul.mubr.bf16.gmra.mxu0 %v322
    %v456 = vpop.f32.mrf.mxu0
    %v457 = vadd.f32 %v348, %v456
    %v458 = vpop.f32.mrf.mxu0
    %v459 = vpop.f32.mrf.mxu0
    %v460 = vadd.f32 %v348, %v459
    %v461 = vpop.f32.mrf.mxu0
    %462 = vmatprep.mubr.bf16.mxu0 0
    %463 = vmatmul.mubr.bf16.gmra.mxu0 %v323
    %v464 = vpop.f32.mrf.mxu0
    %v465 = vadd.f32 %v348, %v464
    %v466 = vpop.f32.mrf.mxu0
    %v467 = vpop.f32.mrf.mxu0
    %v468 = vadd.f32 %v348, %v467
    %v469 = vpop.f32.mrf.mxu0
    %470 = vmatprep.mubr.bf16.mxu0 0
    %471 = vmatmul.mubr.bf16.gmra.mxu0 %v324
    %v472 = vpop.f32.mrf.mxu0
    %v473 = vadd.f32 %v348, %v472
    %v474 = vpop.f32.mrf.mxu0
    %v475 = vpop.f32.mrf.mxu0
    %v476 = vadd.f32 %v348, %v475
    %v477 = vpop.f32.mrf.mxu0
    %478 = vmatprep.mubr.bf16.mxu0 0
    %479 = vmatmul.mubr.bf16.gmra.mxu0 %v325
    %v480 = vpop.f32.mrf.mxu0
    %v481 = vadd.f32 %v348, %v480
    %v482 = vpop.f32.mrf.mxu0
    %v483 = vpop.f32.mrf.mxu0
    %v484 = vadd.f32 %v348, %v483
    %v485 = vpop.f32.mrf.mxu0
    %486 = vmatprep.mubr.bf16.mxu0 0
    %487 = vmatmul.mubr.bf16.gmra.mxu0 %v326
    %v488 = vpop.f32.mrf.mxu0
    %v489 = vadd.f32 %v348, %v488
    %v490 = vpop.f32.mrf.mxu0
    %v491 = vpop.f32.mrf.mxu0
    %v492 = vadd.f32 %v348, %v491
    %v493 = vpop.f32.mrf.mxu0
    %494 = vdwg.mxu0
    %v495 = vmax.f32 %v433, 0.0
    %v496 = vmax.f32 %v436, 0.0
    %v497 = vmax.f32 %v441, 0.0
    %v498 = vmax.f32 %v444, 0.0
    %v499 = vmax.f32 %v449, 0.0
    %v500 = vmax.f32 %v452, 0.0
    %v501 = vmax.f32 %v457, 0.0
    %v502 = vmax.f32 %v460, 0.0
    %v503 = vmax.f32 %v465, 0.0
    %v504 = vmax.f32 %v468, 0.0
    %v505 = vmax.f32 %v473, 0.0
    %v506 = vmax.f32 %v476, 0.0
    %v507 = vmax.f32 %v481, 0.0
    %v508 = vmax.f32 %v484, 0.0
    %v509 = vmax.f32 %v489, 0.0
    %v510 = vmax.f32 %v492, 0.0
    %v511 = vld [vmem:[%s5] sm:$0x1]
    %v512 = vpack.c.bf16 %v496, %v495
    %v513 = vpack.c.bf16 %v498, %v497
    %v514 = vpack.c.bf16 %v500, %v499
    %v515 = vpack.c.bf16 %v502, %v501
    %v516 = vpack.c.bf16 %v504, %v503
    %v517 = vpack.c.bf16 %v506, %v505
    %v518 = vpack.c.bf16 %v508, %v507
    %v519 = vpack.c.bf16 %v510, %v509
    %v520 = vld [vmem:[#allocation2] sm:$0x1]
    %522 = vset.pattern.permute.xlu0 0
    %523 = vperm.xlu0 %522, %v520
    %v524 = vpop.permute.xlu0 %523
    %v526 = vlaneseq
    %v527 = vshrl.u32 %v526, 7
    %v528 = vsub.s32 0, %v527
    %v529 = vrot.slane %v524, %v528
    %530 = vmatprep.subr.bf16.mxu0 0
    %531 = vmatpush1.bf16.xpose.msra.mxu0 %v519
    %532 = vmatprep.subr.bf16.mxu0 0
    %533 = vmatpush1.bf16.xpose.msra.mxu0 %v518
    %534 = vmatprep.subr.bf16.mxu0 0
    %535 = vmatpush1.bf16.xpose.msra.mxu0 %v517
    %536 = vmatprep.subr.bf16.mxu0 0
    %537 = vmatpush1.bf16.xpose.msra.mxu0 %v516
    %538 = vmatprep.subr.bf16.mxu0 0
    %539 = vmatpush1.bf16.xpose.msra.mxu0 %v515
    %540 = vmatprep.subr.bf16.mxu0 0
    %541 = vmatpush1.bf16.xpose.msra.mxu0 %v514
    %542 = vmatprep.subr.bf16.mxu0 0
    %543 = vmatpush1.bf16.xpose.msra.mxu0 %v513
    %544 = vmatprep.subr.bf16.mxu0 0
    %545 = vmatpush1.bf16.xpose.msra.mxu0 %v512
    %546 = vmatprep.subr.bf16.mxu0 0
    %547 = vmatpush2.bf16.xpose.msra.mxu0 0
    %548 = vmatprep.subr.bf16.mxu0 0
    %549 = vmatpush2.bf16.xpose.msra.mxu0 0
    %550 = vmatprep.subr.bf16.mxu0 0
    %551 = vmatpush2.bf16.xpose.msra.mxu0 0
    %552 = vmatprep.subr.bf16.mxu0 0
    %553 = vmatpush2.bf16.xpose.msra.mxu0 0
    %554 = vmatprep.subr.bf16.mxu0 0
    %555 = vmatpush2.bf16.xpose.msra.mxu0 0
    %556 = vmatprep.subr.bf16.mxu0 0
    %557 = vmatpush2.bf16.xpose.msra.mxu0 0
    %558 = vmatprep.subr.bf16.mxu0 0
    %559 = vmatpush2.bf16.xpose.msra.mxu0 0
    %560 = vmatprep.subr.bf16.mxu0 0
    %561 = vmatpush2.bf16.xpose.msra.mxu0 0
    %562 = vmatprep.mubr.bf16.mxu0 0
    %563 = vmatmul.mubr.bf16.gmra.mxu0 %v511
    %v564 = vpop.f32.mrf.mxu0
    %v565 = vadd.f32 %v529, %v564
    %v566 = vpop.f32.mrf.mxu0
    %v567 = vpop.f32.mrf.mxu0
    %v568 = vpop.f32.mrf.mxu0
    %569 = vdwg.mxu0
    %570 = vst [vmem:[#allocation9] sm:$0x1] %v565
    // Predicated region
    $region42: #{tpu_custom_call.1} parent=1 // pred_check
      _
    $region43: #{tpu_custom_call.1} parent=1 // pred_check_branch
      %572 = sbr.rel (0) target = $region45
    $region44: #{tpu_custom_call.1} parent=1 // pred_region
      %s574 = ssub.s32 16, 16
      %575 = vsyncadd [#allocation5], %s574
      %s577 = sshll.u32 [#allocation9], 4
      %s578 = int_to_ptr.vmem [resolvable:$true] %s577
      %580 = dma.vmem_to_hbm [thread:$0]  %s578, 16, %s7, [#allocation5]
    $region45: #{tpu_custom_call.1} parent=1 // pred_fallthru
      _
    // Predicated region
    $region46: #{tpu_custom_call.1} parent=1 // pred_check
      _
    $region47: #{tpu_custom_call.1} parent=1 // pred_check_branch
      %582 = sbr.rel (0) target = $region49
    $region48: #{tpu_custom_call.1} parent=1 // pred_region
      %583 = dma.done [#allocation5], 16
    $region49: #{tpu_custom_call.1} parent=1 // pred_fallthru
      _
    %584 = vsyncpa [#allocation4], 1
    %585 = vsyncpa [#allocation7], 1
    %586 = vsyncpa [#allocation5], 1

</llo_original>
